<compile_context>
chip_gen: v5e
topology: v5e:2x2
jax: 0.10.0
libtpu: 0.0.40
codegen_flags: <defaults>
</compile_context>

<pallas_src>
import functools
import math

import jax
import jax.numpy as jnp
from jax.experimental import pallas as pl
from jax.experimental.pallas import tpu as pltpu

IN_FEATURES = 3 * 32 * 32   # 3072
HIDDEN = 100
OUT_FEATURES = 10

# 1024 rows: per-step overhead <5% of the tile DMA on every generation, and
# the double-buffered f32 x tile (2 x 12 MiB) stays well inside v7x's 64 MiB
# physical VMEM (v5e/v6e have 128 MiB). Do not raise above ~1024 on v7x when
# streaming f32.
DEFAULT_TILE_M = 1024


def _round_up(n, m):
    return ((n + m - 1) // m) * m


def fused_linear_kernel(x_ref, wc_ref, bc_ref, o_ref, *, compute_dtype):
    # x arrives as the raw f32 HBM stream; the narrowing cast runs on the VPU
    # here and hides under the next tile's DMA. MXU accumulates in f32; the
    # bias add and the output stay f32.
    x = x_ref[...].astype(compute_dtype)
    acc = jnp.dot(x, wc_ref[...], preferred_element_type=jnp.float32)
    o_ref[...] = (acc + bc_ref[...]).astype(o_ref.dtype)


def _fused_forward(x, wc_c, bc_f32, *, tile_m, compute_dtype):
    """x: (B, 3072) f32, wc_c: (3072, 10) compute_dtype, bc_f32: (1, 10) f32."""
    B = x.shape[0]

    # Ragged batch tiling (no padded copy of x). tm is always a multiple of 8
    # so the (8, 128) block constraint holds even when B is small / ragged.
    tm = min(_round_up(max(tile_m, 8), 8), _round_up(B, 8))
    grid = (pl.cdiv(B, tm),)

    x_tile_bytes = tm * IN_FEATURES * x.dtype.itemsize
    w_bytes = IN_FEATURES * OUT_FEATURES * jnp.dtype(compute_dtype).itemsize
    o_tile_bytes = tm * OUT_FEATURES * 4
    # Double-buffered tiles + resident weights + headroom for compiler scratch.
    vmem_limit_bytes = min(
        100 << 20,
        max(32 << 20, 2 * (x_tile_bytes + w_bytes + o_tile_bytes) + (8 << 20)),
    )

    bytes_accessed = int(
        B * IN_FEATURES * x.dtype.itemsize   # stream x tiles (f32, no extra pass)
        + w_bytes                            # resident folded weights (once)
        + OUT_FEATURES * 4                   # resident bias (f32)
        + B * OUT_FEATURES * 4               # stream out tiles (f32)
    )

    kernel = functools.partial(fused_linear_kernel, compute_dtype=compute_dtype)

    return pl.pallas_call(
        kernel,
        out_shape=jax.ShapeDtypeStruct((B, OUT_FEATURES), jnp.float32),
        grid=grid,
        in_specs=[
            pl.BlockSpec((tm, IN_FEATURES), lambda i: (i, 0)),
            pl.BlockSpec((IN_FEATURES, OUT_FEATURES), lambda i: (0, 0)),
            pl.BlockSpec((1, OUT_FEATURES), lambda i: (0, 0)),
        ],
        out_specs=pl.BlockSpec((tm, OUT_FEATURES), lambda i: (i, 0)),
        compiler_params=pltpu.CompilerParams(
            # Batch tiles are fully independent -> megacore sharding on v7x.
            dimension_semantics=("parallel",),
            vmem_limit_bytes=int(vmem_limit_bytes),
        ),
        cost_estimate=pl.CostEstimate(
            flops=2 * B * IN_FEATURES * OUT_FEATURES,
            transcendentals=0,
            bytes_accessed=bytes_accessed,
        ),
    )(x, wc_c, bc_f32)


def fold_params(w1, b1, w2, b2, compute_dtype=jnp.bfloat16):
    """Exact algebraic fold of the two affine layers (done in f32)."""
    wc = jnp.dot(w1, w2, preferred_element_type=jnp.float32)           # (3072, 10)
    bc = jnp.dot(b1, w2, preferred_element_type=jnp.float32) + b2      # (1, 10)
    return wc.astype(compute_dtype), bc.astype(jnp.float32)


def make_xiong_liner(w1, b1, w2, b2, *, tile_m=DEFAULT_TILE_M,
                     compute_dtype=jnp.bfloat16):
    """Folds the weights ONCE per weight set and returns a jitted forward(x)."""
    wc_c, bc = fold_params(w1, b1, w2, b2, compute_dtype)

    @jax.jit
    def forward(x):
        return _fused_forward(x, wc_c, bc, tile_m=tile_m,
                              compute_dtype=compute_dtype)

    return forward


def xiong_liner_forward(x, w1, b1, w2, b2, *, tile_m=DEFAULT_TILE_M,
                        compute_dtype=jnp.bfloat16):
    """One-shot functional API (re-folds each call; prefer make_xiong_liner)."""
    wc_c, bc = fold_params(w1, b1, w2, b2, compute_dtype)
    return _fused_forward(x, wc_c, bc, tile_m=tile_m, compute_dtype=compute_dtype)


def init_params(key):
    """Deterministic init matching torch.nn.Linear defaults:
    U(-1/sqrt(fan_in), 1/sqrt(fan_in)) for both weight and bias.
    Stored as (in, out) so the kernel does x @ W (== torch's x @ W.T)."""
    k1, k2, k3, k4 = jax.random.split(key, 4)
    bound1 = 1.0 / math.sqrt(IN_FEATURES)
    bound2 = 1.0 / math.sqrt(HIDDEN)
    w1 = jax.random.uniform(k1, (IN_FEATURES, HIDDEN), jnp.float32, -bound1, bound1)
    b1 = jax.random.uniform(k2, (1, HIDDEN), jnp.float32, -bound1, bound1)
    w2 = jax.random.uniform(k3, (HIDDEN, OUT_FEATURES), jnp.float32, -bound2, bound2)
    b2 = jax.random.uniform(k4, (1, OUT_FEATURES), jnp.float32, -bound2, bound2)
    return w1, b1, w2, b2


if __name__ == "__main__":
    key = jax.random.PRNGKey(0)
    key_x, key_p = jax.random.split(key)

    B = 2
    x = jax.random.normal(key_x, (B, IN_FEATURES), jnp.float32)
    w1, b1, w2, b2 = init_params(key_p)

    # Unfused two-layer reference in plain JAX (the PyTorch forward semantics).
    ref = (x @ w1 + b1) @ w2 + b2

    # 1) Exact-math path: f32 end to end (verifies the fused-kernel algebra).
    out_f32 = jax.block_until_ready(
        xiong_liner_forward(x, w1, b1, w2, b2, compute_dtype=jnp.float32))
    assert out_f32.shape == (B, OUT_FEATURES)
    assert jnp.allclose(out_f32, ref, atol=5e-4, rtol=5e-4)

    # 2) Fast path: folded weights cached once, bf16 MXU operands, f32 accum.
    fwd = make_xiong_liner(w1, b1, w2, b2)
    out = jax.block_until_ready(fwd(x))
    assert out.shape == (B, OUT_FEATURES)
    assert jnp.allclose(out, ref, atol=3e-2, rtol=3e-2)

    # 3) Ragged batch (B not a multiple of 8 / of the tile) exercises the
    #    no-pad path with a partially out-of-bounds last block.
    B2 = 37
    x2 = jax.random.normal(key_x, (B2, IN_FEATURES), jnp.float32)
    ref2 = (x2 @ w1 + b1) @ w2 + b2
    out2 = jax.block_until_ready(fwd(x2))
    assert out2.shape == (B2, OUT_FEATURES)
    assert jnp.allclose(out2, ref2, atol=3e-2, rtol=3e-2)

    print("KERNEL_OK")
</pallas_src>

<mosaic_0001>
module attributes {stable_mosaic.version = 11 : i64} {
  func.func @fused_linear_kernel(%arg0: i32, %arg1: memref<8x3072xf32, #tpu.memory_space<vmem>>, %arg2: memref<3072x10xf32, #tpu.memory_space<vmem>>, %arg3: memref<1x10xf32, #tpu.memory_space<vmem>>, %arg4: memref<8x10xf32, #tpu.memory_space<vmem>>) attributes {dimension_semantics = [#tpu.dimension_semantics<parallel>], iteration_bounds = array<i64: 1>, scalar_prefetch = 0 : i64, scratch_operands = 0 : i64, tpu.core_type = #tpu.core_type<tc>, window_params = [{transform_indices = @transform_0, window_bounds = array<i64: 8, 3072>}, {pipeline_mode = #tpu.pipeline_mode<synchronous>, transform_indices = @transform_1, window_bounds = array<i64: 3072, 10>}, {pipeline_mode = #tpu.pipeline_mode<synchronous>, transform_indices = @transform_2, window_bounds = array<i64: 1, 10>}, {transform_indices = @transform_3, window_bounds = array<i64: 8, 10>}]} {
    %c0 = arith.constant 0 : index
    %c0_0 = arith.constant 0 : index
    %0 = vector.load %arg1[%c0, %c0_0] : memref<8x3072xf32, #tpu.memory_space<vmem>>, vector<8x3072xf32>
    %c0_1 = arith.constant 0 : index
    %c0_2 = arith.constant 0 : index
    %1 = vector.load %arg2[%c0_1, %c0_2] : memref<3072x10xf32, #tpu.memory_space<vmem>>, vector<3072x10xf32>
    %cst = arith.constant dense<0.000000e+00> : vector<8x10xf32>
    %2 = tpu.matmul %0, %1, %cst {dimension_numbers = #tpu.dot_dimension_numbers<[1], [0], [0], [1], [0, 0, 1, 1], [], []>} : vector<8x3072xf32>, vector<3072x10xf32>, vector<8x10xf32> -> vector<8x10xf32>
    %c0_3 = arith.constant 0 : index
    %c0_4 = arith.constant 0 : index
    %3 = vector.load %arg3[%c0_3, %c0_4] : memref<1x10xf32, #tpu.memory_space<vmem>>, vector<1x10xf32>
    %4 = vector.broadcast %3 : vector<1x10xf32> to vector<8x10xf32>
    %5 = arith.addf %2, %4 : vector<8x10xf32>
    %c0_5 = arith.constant 0 : index
    %c0_6 = arith.constant 0 : index
    %6 = vector.load %arg4[%c0_5, %c0_6] : memref<8x10xf32, #tpu.memory_space<vmem>>, vector<8x10xf32>
    tpu.vector_store %arg4[%c0_5, %c0_6], %5 {strides = array<i32>} : memref<8x10xf32, #tpu.memory_space<vmem>>, vector<8x10xf32>,
    return
  }
  func.func @transform_0(%arg0: i32) -> (i32, i32) {
    %c0_i32 = arith.constant 0 : i32
    %c0_i32_0 = arith.constant 0 : i32
    return %arg0, %c0_i32 : i32, i32
  }
  func.func @transform_1(%arg0: i32) -> (i32, i32) {
    %c0_i32 = arith.constant 0 : i32
    %c0_i32_0 = arith.constant 0 : i32
    %c0_i32_1 = arith.constant 0 : i32
    return %c0_i32, %c0_i32_0 : i32, i32
  }
  func.func @transform_2(%arg0: i32) -> (i32, i32) {
    %c0_i32 = arith.constant 0 : i32
    %c0_i32_0 = arith.constant 0 : i32
    %c0_i32_1 = arith.constant 0 : i32
    return %c0_i32, %c0_i32_0 : i32, i32
  }
  func.func @transform_3(%arg0: i32) -> (i32, i32) {
    %c0_i32 = arith.constant 0 : i32
    %c0_i32_0 = arith.constant 0 : i32
    return %arg0, %c0_i32 : i32, i32
  }
}

</mosaic_0001>

<llo_original>
// kernel: tpu_custom_call.1
$region0: #{tpu_custom_call.1}
  #allocation0 [shape = 'u32[]', space=smem, size = 0x4, offset = 0x4, fixed_abs, tag = 'smem constant byte address 0x4 - core index']
  #allocation1 [shape = 'u32[72,128]{1,0:T(1,128)}', space=vmem, size = 0x9000, scoped, tag = 'internal scratch']
  %s0 = inlined_call_operand.vmem [shape: f32[2,3072], index: 0, kind: input, shape index: {}]
  %s1 = inlined_call_operand.vmem [shape: f32[3072,10], index: 1, kind: input, shape index: {}]
  %s2 = inlined_call_operand.vmem [shape: f32[1,10], index: 2, kind: input, shape index: {}]
  %s3 = inlined_call_operand.hbm [shape: f32[2,10], index: 3, kind: output, shape index: {}]
  %s4 = sld [smem:[#allocation0]]
  $region22: #{tpu_custom_call.1} parent=0
    _
  %s6 = ssub.s32 1, %s4
  %s7 = scalar_select 0, %s6, %s4
  $region1: #{tpu_custom_call.1} parent=0
    #allocation2 [shape = 'u8[4096]{0}', space=vmem, size = 0x1000, scoped, tag = 'output window, operand 0, single buffered']
    #allocation3 [shape = 's32[1]{0}', space=sflag, size = 0x4, scoped, tag = 'scoped memory for tpu_custom_call.1']
    %8 = vsyncpa [#allocation3], 0
    // Predicated region
    $region2: #{tpu_custom_call.1} parent=1 // pred_check
      _
    $region3: #{tpu_custom_call.1} parent=1 // pred_check_branch
      %10 = sbr.rel (0) target = $region5
    $region4: #{tpu_custom_call.1} parent=1 // pred_region
      _
    $region5: #{tpu_custom_call.1} parent=1 // pred_fallthru
      _
    // Predicated region
    $region6: #{tpu_custom_call.1} parent=1 // pred_check
      _
    $region7: #{tpu_custom_call.1} parent=1 // pred_check_branch
      %12 = sbr.rel (0) target = $region9
    $region8: #{tpu_custom_call.1} parent=1 // pred_region
      _
    $region9: #{tpu_custom_call.1} parent=1 // pred_fallthru
      _
    // Predicated region
    $region10: #{tpu_custom_call.1} parent=1 // pred_check
      _
    $region11: #{tpu_custom_call.1} parent=1 // pred_check_branch
      %14 = sbr.rel (0) target = $region13
    $region12: #{tpu_custom_call.1} parent=1 // pred_region
      _
    $region13: #{tpu_custom_call.1} parent=1 // pred_fallthru
      _
    %v15 = vld [vmem:[%s0] sm:$0xff]
    %v16 = vld [vmem:[%s0 + $0x8] sm:$0xff]
    %v17 = vld [vmem:[%s0 + $0x10] sm:$0xff]
    %v18 = vld [vmem:[%s0 + $0x18] sm:$0xff]
    %v19 = vld [vmem:[%s0 + $0x20] sm:$0xff]
    %v20 = vld [vmem:[%s0 + $0x28] sm:$0xff]
    %v21 = vld [vmem:[%s0 + $0x30] sm:$0xff]
    %v22 = vld [vmem:[%s0 + $0x38] sm:$0xff]
    %v23 = vld [vmem:[%s0 + $0x40] sm:$0xff]
    %v24 = vld [vmem:[%s0 + $0x48] sm:$0xff]
    %v25 = vld [vmem:[%s0 + $0x50] sm:$0xff]
    %v26 = vld [vmem:[%s0 + $0x58] sm:$0xff]
    %v27 = vld [vmem:[%s0 + $0x60] sm:$0xff]
    %v28 = vld [vmem:[%s0 + $0x68] sm:$0xff]
    %v29 = vld [vmem:[%s0 + $0x70] sm:$0xff]
    %v30 = vld [vmem:[%s0 + $0x78] sm:$0xff]
    %v31 = vld [vmem:[%s0 + $0x80] sm:$0xff]
    %v32 = vld [vmem:[%s0 + $0x88] sm:$0xff]
    %v33 = vld [vmem:[%s0 + $0x90] sm:$0xff]
    %v34 = vld [vmem:[%s0 + $0x98] sm:$0xff]
    %v35 = vld [vmem:[%s0 + $0xa0] sm:$0xff]
    %v36 = vld [vmem:[%s0 + $0xa8] sm:$0xff]
    %v37 = vld [vmem:[%s0 + $0xb0] sm:$0xff]
    %v38 = vld [vmem:[%s0 + $0xb8] sm:$0xff]
    %v39 = vld [vmem:[%s1] sm:$0xff]
    %v40 = vld [vmem:[%s1 + $0x8] sm:$0xff]
    %v41 = vld [vmem:[%s1 + $0x10] sm:$0xff]
    %v42 = vld [vmem:[%s1 + $0x18] sm:$0xff]
    %v43 = vld [vmem:[%s1 + $0x20] sm:$0xff]
    %v44 = vld [vmem:[%s1 + $0x28] sm:$0xff]
    %v45 = vld [vmem:[%s1 + $0x30] sm:$0xff]
    %v46 = vld [vmem:[%s1 + $0x38] sm:$0xff]
    %v47 = vld [vmem:[%s1 + $0x40] sm:$0xff]
    %v48 = vld [vmem:[%s1 + $0x48] sm:$0xff]
    %v49 = vld [vmem:[%s1 + $0x50] sm:$0xff]
    %v50 = vld [vmem:[%s1 + $0x58] sm:$0xff]
    %v51 = vld [vmem:[%s1 + $0x60] sm:$0xff]
    %v52 = vld [vmem:[%s1 + $0x68] sm:$0xff]
    %v53 = vld [vmem:[%s1 + $0x70] sm:$0xff]
    %v54 = vld [vmem:[%s1 + $0x78] sm:$0xff]
    %v55 = vld [vmem:[%s1 + $0x80] sm:$0xff]
    %v56 = vld [vmem:[%s1 + $0x88] sm:$0xff]
    %v57 = vld [vmem:[%s1 + $0x90] sm:$0xff]
    %v58 = vld [vmem:[%s1 + $0x98] sm:$0xff]
    %v59 = vld [vmem:[%s1 + $0xa0] sm:$0xff]
    %v60 = vld [vmem:[%s1 + $0xa8] sm:$0xff]
    %v61 = vld [vmem:[%s1 + $0xb0] sm:$0xff]
    %v62 = vld [vmem:[%s1 + $0xb8] sm:$0xff]
    %v63 = vld [vmem:[%s1 + $0xc0] sm:$0xff]
    %v64 = vld [vmem:[%s1 + $0xc8] sm:$0xff]
    %v65 = vld [vmem:[%s1 + $0xd0] sm:$0xff]
    %v66 = vld [vmem:[%s1 + $0xd8] sm:$0xff]
    %v67 = vld [vmem:[%s1 + $0xe0] sm:$0xff]
    %v68 = vld [vmem:[%s1 + $0xe8] sm:$0xff]
    %v69 = vld [vmem:[%s1 + $0xf0] sm:$0xff]
    %v70 = vld [vmem:[%s1 + $0xf8] sm:$0xff]
    %v71 = vld [vmem:[%s1 + $0x100] sm:$0xff]
    %v72 = vld [vmem:[%s1 + $0x108] sm:$0xff]
    %v73 = vld [vmem:[%s1 + $0x110] sm:$0xff]
    %v74 = vld [vmem:[%s1 + $0x118] sm:$0xff]
    %v75 = vld [vmem:[%s1 + $0x120] sm:$0xff]
    %v76 = vld [vmem:[%s1 + $0x128] sm:$0xff]
    %v77 = vld [vmem:[%s1 + $0x130] sm:$0xff]
    %v78 = vld [vmem:[%s1 + $0x138] sm:$0xff]
    %v79 = vld [vmem:[%s1 + $0x140] sm:$0xff]
    %v80 = vld [vmem:[%s1 + $0x148] sm:$0xff]
    %v81 = vld [vmem:[%s1 + $0x150] sm:$0xff]
    %v82 = vld [vmem:[%s1 + $0x158] sm:$0xff]
    %v83 = vld [vmem:[%s1 + $0x160] sm:$0xff]
    %v84 = vld [vmem:[%s1 + $0x168] sm:$0xff]
    %v85 = vld [vmem:[%s1 + $0x170] sm:$0xff]
    %v86 = vld [vmem:[%s1 + $0x178] sm:$0xff]
    %v87 = vld [vmem:[%s1 + $0x180] sm:$0xff]
    %v88 = vld [vmem:[%s1 + $0x188] sm:$0xff]
    %v89 = vld [vmem:[%s1 + $0x190] sm:$0xff]
    %v90 = vld [vmem:[%s1 + $0x198] sm:$0xff]
    %v91 = vld [vmem:[%s1 + $0x1a0] sm:$0xff]
    %v92 = vld [vmem:[%s1 + $0x1a8] sm:$0xff]
    %v93 = vld [vmem:[%s1 + $0x1b0] sm:$0xff]
    %v94 = vld [vmem:[%s1 + $0x1b8] sm:$0xff]
    %v95 = vld [vmem:[%s1 + $0x1c0] sm:$0xff]
    %v96 = vld [vmem:[%s1 + $0x1c8] sm:$0xff]
    %v97 = vld [vmem:[%s1 + $0x1d0] sm:$0xff]
    %v98 = vld [vmem:[%s1 + $0x1d8] sm:$0xff]
    %v99 = vld [vmem:[%s1 + $0x1e0] sm:$0xff]
    %v100 = vld [vmem:[%s1 + $0x1e8] sm:$0xff]
    %v101 = vld [vmem:[%s1 + $0x1f0] sm:$0xff]
    %v102 = vld [vmem:[%s1 + $0x1f8] sm:$0xff]
    %v103 = vld [vmem:[%s1 + $0x200] sm:$0xff]
    %v104 = vld [vmem:[%s1 + $0x208] sm:$0xff]
    %v105 = vld [vmem:[%s1 + $0x210] sm:$0xff]
    %v106 = vld [vmem:[%s1 + $0x218] sm:$0xff]
    %v107 = vld [vmem:[%s1 + $0x220] sm:$0xff]
    %v108 = vld [vmem:[%s1 + $0x228] sm:$0xff]
    %v109 = vld [vmem:[%s1 + $0x230] sm:$0xff]
    %v110 = vld [vmem:[%s1 + $0x238] sm:$0xff]
    %v111 = vld [vmem:[%s1 + $0x240] sm:$0xff]
    %v112 = vld [vmem:[%s1 + $0x248] sm:$0xff]
    %v113 = vld [vmem:[%s1 + $0x250] sm:$0xff]
    %v114 = vld [vmem:[%s1 + $0x258] sm:$0xff]
    %v115 = vld [vmem:[%s1 + $0x260] sm:$0xff]
    %v116 = vld [vmem:[%s1 + $0x268] sm:$0xff]
    %v117 = vld [vmem:[%s1 + $0x270] sm:$0xff]
    %v118 = vld [vmem:[%s1 + $0x278] sm:$0xff]
    %v119 = vld [vmem:[%s1 + $0x280] sm:$0xff]
    %v120 = vld [vmem:[%s1 + $0x288] sm:$0xff]
    %v121 = vld [vmem:[%s1 + $0x290] sm:$0xff]
    %v122 = vld [vmem:[%s1 + $0x298] sm:$0xff]
    %v123 = vld [vmem:[%s1 + $0x2a0] sm:$0xff]
    %v124 = vld [vmem:[%s1 + $0x2a8] sm:$0xff]
    %v125 = vld [vmem:[%s1 + $0x2b0] sm:$0xff]
    %v126 = vld [vmem:[%s1 + $0x2b8] sm:$0xff]
    %v127 = vld [vmem:[%s1 + $0x2c0] sm:$0xff]
    %v128 = vld [vmem:[%s1 + $0x2c8] sm:$0xff]
    %v129 = vld [vmem:[%s1 + $0x2d0] sm:$0xff]
    %v130 = vld [vmem:[%s1 + $0x2d8] sm:$0xff]
    %v131 = vld [vmem:[%s1 + $0x2e0] sm:$0xff]
    %v132 = vld [vmem:[%s1 + $0x2e8] sm:$0xff]
    %v133 = vld [vmem:[%s1 + $0x2f0] sm:$0xff]
    %v134 = vld [vmem:[%s1 + $0x2f8] sm:$0xff]
    %v135 = vld [vmem:[%s1 + $0x300] sm:$0xff]
    %v136 = vld [vmem:[%s1 + $0x308] sm:$0xff]
    %v137 = vld [vmem:[%s1 + $0x310] sm:$0xff]
    %v138 = vld [vmem:[%s1 + $0x318] sm:$0xff]
    %v139 = vld [vmem:[%s1 + $0x320] sm:$0xff]
    %v140 = vld [vmem:[%s1 + $0x328] sm:$0xff]
    %v141 = vld [vmem:[%s1 + $0x330] sm:$0xff]
    %v142 = vld [vmem:[%s1 + $0x338] sm:$0xff]
    %v143 = vld [vmem:[%s1 + $0x340] sm:$0xff]
    %v144 = vld [vmem:[%s1 + $0x348] sm:$0xff]
    %v145 = vld [vmem:[%s1 + $0x350] sm:$0xff]
    %v146 = vld [vmem:[%s1 + $0x358] sm:$0xff]
    %v147 = vld [vmem:[%s1 + $0x360] sm:$0xff]
    %v148 = vld [vmem:[%s1 + $0x368] sm:$0xff]
    %v149 = vld [vmem:[%s1 + $0x370] sm:$0xff]
    %v150 = vld [vmem:[%s1 + $0x378] sm:$0xff]
    %v151 = vld [vmem:[%s1 + $0x380] sm:$0xff]
    %v152 = vld [vmem:[%s1 + $0x388] sm:$0xff]
    %v153 = vld [vmem:[%s1 + $0x390] sm:$0xff]
    %v154 = vld [vmem:[%s1 + $0x398] sm:$0xff]
    %v155 = vld [vmem:[%s1 + $0x3a0] sm:$0xff]
    %v156 = vld [vmem:[%s1 + $0x3a8] sm:$0xff]
    %v157 = vld [vmem:[%s1 + $0x3b0] sm:$0xff]
    %v158 = vld [vmem:[%s1 + $0x3b8] sm:$0xff]
    %v159 = vld [vmem:[%s1 + $0x3c0] sm:$0xff]
    %v160 = vld [vmem:[%s1 + $0x3c8] sm:$0xff]
    %v161 = vld [vmem:[%s1 + $0x3d0] sm:$0xff]
    %v162 = vld [vmem:[%s1 + $0x3d8] sm:$0xff]
    %v163 = vld [vmem:[%s1 + $0x3e0] sm:$0xff]
    %v164 = vld [vmem:[%s1 + $0x3e8] sm:$0xff]
    %v165 = vld [vmem:[%s1 + $0x3f0] sm:$0xff]
    %v166 = vld [vmem:[%s1 + $0x3f8] sm:$0xff]
    %v167 = vld [vmem:[%s1 + $0x400] sm:$0xff]
    %v168 = vld [vmem:[%s1 + $0x408] sm:$0xff]
    %v169 = vld [vmem:[%s1 + $0x410] sm:$0xff]
    %v170 = vld [vmem:[%s1 + $0x418] sm:$0xff]
    %v171 = vld [vmem:[%s1 + $0x420] sm:$0xff]
    %v172 = vld [vmem:[%s1 + $0x428] sm:$0xff]
    %v173 = vld [vmem:[%s1 + $0x430] sm:$0xff]
    %v174 = vld [vmem:[%s1 + $0x438] sm:$0xff]
    %v175 = vld [vmem:[%s1 + $0x440] sm:$0xff]
    %v176 = vld [vmem:[%s1 + $0x448] sm:$0xff]
    %v177 = vld [vmem:[%s1 + $0x450] sm:$0xff]
    %v178 = vld [vmem:[%s1 + $0x458] sm:$0xff]
    %v179 = vld [vmem:[%s1 + $0x460] sm:$0xff]
    %v180 = vld [vmem:[%s1 + $0x468] sm:$0xff]
    %v181 = vld [vmem:[%s1 + $0x470] sm:$0xff]
    %v182 = vld [vmem:[%s1 + $0x478] sm:$0xff]
    %v183 = vld [vmem:[%s1 + $0x480] sm:$0xff]
    %v184 = vld [vmem:[%s1 + $0x488] sm:$0xff]
    %v185 = vld [vmem:[%s1 + $0x490] sm:$0xff]
    %v186 = vld [vmem:[%s1 + $0x498] sm:$0xff]
    %v187 = vld [vmem:[%s1 + $0x4a0] sm:$0xff]
    %v188 = vld [vmem:[%s1 + $0x4a8] sm:$0xff]
    %v189 = vld [vmem:[%s1 + $0x4b0] sm:$0xff]
    %v190 = vld [vmem:[%s1 + $0x4b8] sm:$0xff]
    %v191 = vld [vmem:[%s1 + $0x4c0] sm:$0xff]
    %v192 = vld [vmem:[%s1 + $0x4c8] sm:$0xff]
    %v193 = vld [vmem:[%s1 + $0x4d0] sm:$0xff]
    %v194 = vld [vmem:[%s1 + $0x4d8] sm:$0xff]
    %v195 = vld [vmem:[%s1 + $0x4e0] sm:$0xff]
    %v196 = vld [vmem:[%s1 + $0x4e8] sm:$0xff]
    %v197 = vld [vmem:[%s1 + $0x4f0] sm:$0xff]
    %v198 = vld [vmem:[%s1 + $0x4f8] sm:$0xff]
    %v199 = vld [vmem:[%s1 + $0x500] sm:$0xff]
    %v200 = vld [vmem:[%s1 + $0x508] sm:$0xff]
    %v201 = vld [vmem:[%s1 + $0x510] sm:$0xff]
    %v202 = vld [vmem:[%s1 + $0x518] sm:$0xff]
    %v203 = vld [vmem:[%s1 + $0x520] sm:$0xff]
    %v204 = vld [vmem:[%s1 + $0x528] sm:$0xff]
    %v205 = vld [vmem:[%s1 + $0x530] sm:$0xff]
    %v206 = vld [vmem:[%s1 + $0x538] sm:$0xff]
    %v207 = vld [vmem:[%s1 + $0x540] sm:$0xff]
    %v208 = vld [vmem:[%s1 + $0x548] sm:$0xff]
    %v209 = vld [vmem:[%s1 + $0x550] sm:$0xff]
    %v210 = vld [vmem:[%s1 + $0x558] sm:$0xff]
    %v211 = vld [vmem:[%s1 + $0x560] sm:$0xff]
    %v212 = vld [vmem:[%s1 + $0x568] sm:$0xff]
    %v213 = vld [vmem:[%s1 + $0x570] sm:$0xff]
    %v214 = vld [vmem:[%s1 + $0x578] sm:$0xff]
    %v215 = vld [vmem:[%s1 + $0x580] sm:$0xff]
    %v216 = vld [vmem:[%s1 + $0x588] sm:$0xff]
    %v217 = vld [vmem:[%s1 + $0x590] sm:$0xff]
    %v218 = vld [vmem:[%s1 + $0x598] sm:$0xff]
    %v219 = vld [vmem:[%s1 + $0x5a0] sm:$0xff]
    %v220 = vld [vmem:[%s1 + $0x5a8] sm:$0xff]
    %v221 = vld [vmem:[%s1 + $0x5b0] sm:$0xff]
    %v222 = vld [vmem:[%s1 + $0x5b8] sm:$0xff]
    %v223 = vld [vmem:[%s1 + $0x5c0] sm:$0xff]
    %v224 = vld [vmem:[%s1 + $0x5c8] sm:$0xff]
    %v225 = vld [vmem:[%s1 + $0x5d0] sm:$0xff]
    %v226 = vld [vmem:[%s1 + $0x5d8] sm:$0xff]
    %v227 = vld [vmem:[%s1 + $0x5e0] sm:$0xff]
    %v228 = vld [vmem:[%s1 + $0x5e8] sm:$0xff]
    %v229 = vld [vmem:[%s1 + $0x5f0] sm:$0xff]
    %v230 = vld [vmem:[%s1 + $0x5f8] sm:$0xff]
    %v231 = vld [vmem:[%s1 + $0x600] sm:$0xff]
    %v232 = vld [vmem:[%s1 + $0x608] sm:$0xff]
    %v233 = vld [vmem:[%s1 + $0x610] sm:$0xff]
    %v234 = vld [vmem:[%s1 + $0x618] sm:$0xff]
    %v235 = vld [vmem:[%s1 + $0x620] sm:$0xff]
    %v236 = vld [vmem:[%s1 + $0x628] sm:$0xff]
    %v237 = vld [vmem:[%s1 + $0x630] sm:$0xff]
    %v238 = vld [vmem:[%s1 + $0x638] sm:$0xff]
    %v239 = vld [vmem:[%s1 + $0x640] sm:$0xff]
    %v240 = vld [vmem:[%s1 + $0x648] sm:$0xff]
    %v241 = vld [vmem:[%s1 + $0x650] sm:$0xff]
    %v242 = vld [vmem:[%s1 + $0x658] sm:$0xff]
    %v243 = vld [vmem:[%s1 + $0x660] sm:$0xff]
    %v244 = vld [vmem:[%s1 + $0x668] sm:$0xff]
    %v245 = vld [vmem:[%s1 + $0x670] sm:$0xff]
    %v246 = vld [vmem:[%s1 + $0x678] sm:$0xff]
    %v247 = vld [vmem:[%s1 + $0x680] sm:$0xff]
    %v248 = vld [vmem:[%s1 + $0x688] sm:$0xff]
    %v249 = vld [vmem:[%s1 + $0x690] sm:$0xff]
    %v250 = vld [vmem:[%s1 + $0x698] sm:$0xff]
    %v251 = vld [vmem:[%s1 + $0x6a0] sm:$0xff]
    %v252 = vld [vmem:[%s1 + $0x6a8] sm:$0xff]
    %v253 = vld [vmem:[%s1 + $0x6b0] sm:$0xff]
    %v254 = vld [vmem:[%s1 + $0x6b8] sm:$0xff]
    %v255 = vld [vmem:[%s1 + $0x6c0] sm:$0xff]
    %v256 = vld [vmem:[%s1 + $0x6c8] sm:$0xff]
    %v257 = vld [vmem:[%s1 + $0x6d0] sm:$0xff]
    %v258 = vld [vmem:[%s1 + $0x6d8] sm:$0xff]
    %v259 = vld [vmem:[%s1 + $0x6e0] sm:$0xff]
    %v260 = vld [vmem:[%s1 + $0x6e8] sm:$0xff]
    %v261 = vld [vmem:[%s1 + $0x6f0] sm:$0xff]
    %v262 = vld [vmem:[%s1 + $0x6f8] sm:$0xff]
    %v263 = vld [vmem:[%s1 + $0x700] sm:$0xff]
    %v264 = vld [vmem:[%s1 + $0x708] sm:$0xff]
    %v265 = vld [vmem:[%s1 + $0x710] sm:$0xff]
    %v266 = vld [vmem:[%s1 + $0x718] sm:$0xff]
    %v267 = vld [vmem:[%s1 + $0x720] sm:$0xff]
    %v268 = vld [vmem:[%s1 + $0x728] sm:$0xff]
    %v269 = vld [vmem:[%s1 + $0x730] sm:$0xff]
    %v270 = vld [vmem:[%s1 + $0x738] sm:$0xff]
    %v271 = vld [vmem:[%s1 + $0x740] sm:$0xff]
    %v272 = vld [vmem:[%s1 + $0x748] sm:$0xff]
    %v273 = vld [vmem:[%s1 + $0x750] sm:$0xff]
    %v274 = vld [vmem:[%s1 + $0x758] sm:$0xff]
    %v275 = vld [vmem:[%s1 + $0x760] sm:$0xff]
    %v276 = vld [vmem:[%s1 + $0x768] sm:$0xff]
    %v277 = vld [vmem:[%s1 + $0x770] sm:$0xff]
    %v278 = vld [vmem:[%s1 + $0x778] sm:$0xff]
    %v279 = vld [vmem:[%s1 + $0x780] sm:$0xff]
    %v280 = vld [vmem:[%s1 + $0x788] sm:$0xff]
    %v281 = vld [vmem:[%s1 + $0x790] sm:$0xff]
    %v282 = vld [vmem:[%s1 + $0x798] sm:$0xff]
    %v283 = vld [vmem:[%s1 + $0x7a0] sm:$0xff]
    %v284 = vld [vmem:[%s1 + $0x7a8] sm:$0xff]
    %v285 = vld [vmem:[%s1 + $0x7b0] sm:$0xff]
    %v286 = vld [vmem:[%s1 + $0x7b8] sm:$0xff]
    %v287 = vld [vmem:[%s1 + $0x7c0] sm:$0xff]
    %v288 = vld [vmem:[%s1 + $0x7c8] sm:$0xff]
    %v289 = vld [vmem:[%s1 + $0x7d0] sm:$0xff]
    %v290 = vld [vmem:[%s1 + $0x7d8] sm:$0xff]
    %v291 = vld [vmem:[%s1 + $0x7e0] sm:$0xff]
    %v292 = vld [vmem:[%s1 + $0x7e8] sm:$0xff]
    %v293 = vld [vmem:[%s1 + $0x7f0] sm:$0xff]
    %v294 = vld [vmem:[%s1 + $0x7f8] sm:$0xff]
    %v295 = vld [vmem:[%s1 + $0x800] sm:$0xff]
    %v296 = vld [vmem:[%s1 + $0x808] sm:$0xff]
    %v297 = vld [vmem:[%s1 + $0x810] sm:$0xff]
    %v298 = vld [vmem:[%s1 + $0x818] sm:$0xff]
    %v299 = vld [vmem:[%s1 + $0x820] sm:$0xff]
    %v300 = vld [vmem:[%s1 + $0x828] sm:$0xff]
    %v301 = vld [vmem:[%s1 + $0x830] sm:$0xff]
    %v302 = vld [vmem:[%s1 + $0x838] sm:$0xff]
    %v303 = vld [vmem:[%s1 + $0x840] sm:$0xff]
    %v304 = vld [vmem:[%s1 + $0x848] sm:$0xff]
    %v305 = vld [vmem:[%s1 + $0x850] sm:$0xff]
    %v306 = vld [vmem:[%s1 + $0x858] sm:$0xff]
    %v307 = vld [vmem:[%s1 + $0x860] sm:$0xff]
    %v308 = vld [vmem:[%s1 + $0x868] sm:$0xff]
    %v309 = vld [vmem:[%s1 + $0x870] sm:$0xff]
    %v310 = vld [vmem:[%s1 + $0x878] sm:$0xff]
    %v311 = vld [vmem:[%s1 + $0x880] sm:$0xff]
    %v312 = vld [vmem:[%s1 + $0x888] sm:$0xff]
    %v313 = vld [vmem:[%s1 + $0x890] sm:$0xff]
    %v314 = vld [vmem:[%s1 + $0x898] sm:$0xff]
    %v315 = vld [vmem:[%s1 + $0x8a0] sm:$0xff]
    %v316 = vld [vmem:[%s1 + $0x8a8] sm:$0xff]
    %v317 = vld [vmem:[%s1 + $0x8b0] sm:$0xff]
    %v318 = vld [vmem:[%s1 + $0x8b8] sm:$0xff]
    %v319 = vld [vmem:[%s1 + $0x8c0] sm:$0xff]
    %v320 = vld [vmem:[%s1 + $0x8c8] sm:$0xff]
    %v321 = vld [vmem:[%s1 + $0x8d0] sm:$0xff]
    %v322 = vld [vmem:[%s1 + $0x8d8] sm:$0xff]
    %v323 = vld [vmem:[%s1 + $0x8e0] sm:$0xff]
    %v324 = vld [vmem:[%s1 + $0x8e8] sm:$0xff]
    %v325 = vld [vmem:[%s1 + $0x8f0] sm:$0xff]
    %v326 = vld [vmem:[%s1 + $0x8f8] sm:$0xff]
    %v327 = vld [vmem:[%s1 + $0x900] sm:$0xff]
    %v328 = vld [vmem:[%s1 + $0x908] sm:$0xff]
    %v329 = vld [vmem:[%s1 + $0x910] sm:$0xff]
    %v330 = vld [vmem:[%s1 + $0x918] sm:$0xff]
    %v331 = vld [vmem:[%s1 + $0x920] sm:$0xff]
    %v332 = vld [vmem:[%s1 + $0x928] sm:$0xff]
    %v333 = vld [vmem:[%s1 + $0x930] sm:$0xff]
    %v334 = vld [vmem:[%s1 + $0x938] sm:$0xff]
    %v335 = vld [vmem:[%s1 + $0x940] sm:$0xff]
    %v336 = vld [vmem:[%s1 + $0x948] sm:$0xff]
    %v337 = vld [vmem:[%s1 + $0x950] sm:$0xff]
    %v338 = vld [vmem:[%s1 + $0x958] sm:$0xff]
    %v339 = vld [vmem:[%s1 + $0x960] sm:$0xff]
    %v340 = vld [vmem:[%s1 + $0x968] sm:$0xff]
    %v341 = vld [vmem:[%s1 + $0x970] sm:$0xff]
    %v342 = vld [vmem:[%s1 + $0x978] sm:$0xff]
    %v343 = vld [vmem:[%s1 + $0x980] sm:$0xff]
    %v344 = vld [vmem:[%s1 + $0x988] sm:$0xff]
    %v345 = vld [vmem:[%s1 + $0x990] sm:$0xff]
    %v346 = vld [vmem:[%s1 + $0x998] sm:$0xff]
    %v347 = vld [vmem:[%s1 + $0x9a0] sm:$0xff]
    %v348 = vld [vmem:[%s1 + $0x9a8] sm:$0xff]
    %v349 = vld [vmem:[%s1 + $0x9b0] sm:$0xff]
    %v350 = vld [vmem:[%s1 + $0x9b8] sm:$0xff]
    %v351 = vld [vmem:[%s1 + $0x9c0] sm:$0xff]
    %v352 = vld [vmem:[%s1 + $0x9c8] sm:$0xff]
    %v353 = vld [vmem:[%s1 + $0x9d0] sm:$0xff]
    %v354 = vld [vmem:[%s1 + $0x9d8] sm:$0xff]
    %v355 = vld [vmem:[%s1 + $0x9e0] sm:$0xff]
    %v356 = vld [vmem:[%s1 + $0x9e8] sm:$0xff]
    %v357 = vld [vmem:[%s1 + $0x9f0] sm:$0xff]
    %v358 = vld [vmem:[%s1 + $0x9f8] sm:$0xff]
    %v359 = vld [vmem:[%s1 + $0xa00] sm:$0xff]
    %v360 = vld [vmem:[%s1 + $0xa08] sm:$0xff]
    %v361 = vld [vmem:[%s1 + $0xa10] sm:$0xff]
    %v362 = vld [vmem:[%s1 + $0xa18] sm:$0xff]
    %v363 = vld [vmem:[%s1 + $0xa20] sm:$0xff]
    %v364 = vld [vmem:[%s1 + $0xa28] sm:$0xff]
    %v365 = vld [vmem:[%s1 + $0xa30] sm:$0xff]
    %v366 = vld [vmem:[%s1 + $0xa38] sm:$0xff]
    %v367 = vld [vmem:[%s1 + $0xa40] sm:$0xff]
    %v368 = vld [vmem:[%s1 + $0xa48] sm:$0xff]
    %v369 = vld [vmem:[%s1 + $0xa50] sm:$0xff]
    %v370 = vld [vmem:[%s1 + $0xa58] sm:$0xff]
    %v371 = vld [vmem:[%s1 + $0xa60] sm:$0xff]
    %v372 = vld [vmem:[%s1 + $0xa68] sm:$0xff]
    %v373 = vld [vmem:[%s1 + $0xa70] sm:$0xff]
    %v374 = vld [vmem:[%s1 + $0xa78] sm:$0xff]
    %v375 = vld [vmem:[%s1 + $0xa80] sm:$0xff]
    %v376 = vld [vmem:[%s1 + $0xa88] sm:$0xff]
    %v377 = vld [vmem:[%s1 + $0xa90] sm:$0xff]
    %v378 = vld [vmem:[%s1 + $0xa98] sm:$0xff]
    %v379 = vld [vmem:[%s1 + $0xaa0] sm:$0xff]
    %v380 = vld [vmem:[%s1 + $0xaa8] sm:$0xff]
    %v381 = vld [vmem:[%s1 + $0xab0] sm:$0xff]
    %v382 = vld [vmem:[%s1 + $0xab8] sm:$0xff]
    %v383 = vld [vmem:[%s1 + $0xac0] sm:$0xff]
    %v384 = vld [vmem:[%s1 + $0xac8] sm:$0xff]
    %v385 = vld [vmem:[%s1 + $0xad0] sm:$0xff]
    %v386 = vld [vmem:[%s1 + $0xad8] sm:$0xff]
    %v387 = vld [vmem:[%s1 + $0xae0] sm:$0xff]
    %v388 = vld [vmem:[%s1 + $0xae8] sm:$0xff]
    %v389 = vld [vmem:[%s1 + $0xaf0] sm:$0xff]
    %v390 = vld [vmem:[%s1 + $0xaf8] sm:$0xff]
    %v391 = vld [vmem:[%s1 + $0xb00] sm:$0xff]
    %v392 = vld [vmem:[%s1 + $0xb08] sm:$0xff]
    %v393 = vld [vmem:[%s1 + $0xb10] sm:$0xff]
    %v394 = vld [vmem:[%s1 + $0xb18] sm:$0xff]
    %v395 = vld [vmem:[%s1 + $0xb20] sm:$0xff]
    %v396 = vld [vmem:[%s1 + $0xb28] sm:$0xff]
    %v397 = vld [vmem:[%s1 + $0xb30] sm:$0xff]
    %v398 = vld [vmem:[%s1 + $0xb38] sm:$0xff]
    %v399 = vld [vmem:[%s1 + $0xb40] sm:$0xff]
    %v400 = vld [vmem:[%s1 + $0xb48] sm:$0xff]
    %v401 = vld [vmem:[%s1 + $0xb50] sm:$0xff]
    %v402 = vld [vmem:[%s1 + $0xb58] sm:$0xff]
    %v403 = vld [vmem:[%s1 + $0xb60] sm:$0xff]
    %v404 = vld [vmem:[%s1 + $0xb68] sm:$0xff]
    %v405 = vld [vmem:[%s1 + $0xb70] sm:$0xff]
    %v406 = vld [vmem:[%s1 + $0xb78] sm:$0xff]
    %v407 = vld [vmem:[%s1 + $0xb80] sm:$0xff]
    %v408 = vld [vmem:[%s1 + $0xb88] sm:$0xff]
    %v409 = vld [vmem:[%s1 + $0xb90] sm:$0xff]
    %v410 = vld [vmem:[%s1 + $0xb98] sm:$0xff]
    %v411 = vld [vmem:[%s1 + $0xba0] sm:$0xff]
    %v412 = vld [vmem:[%s1 + $0xba8] sm:$0xff]
    %v413 = vld [vmem:[%s1 + $0xbb0] sm:$0xff]
    %v414 = vld [vmem:[%s1 + $0xbb8] sm:$0xff]
    %v415 = vld [vmem:[%s1 + $0xbc0] sm:$0xff]
    %v416 = vld [vmem:[%s1 + $0xbc8] sm:$0xff]
    %v417 = vld [vmem:[%s1 + $0xbd0] sm:$0xff]
    %v418 = vld [vmem:[%s1 + $0xbd8] sm:$0xff]
    %v419 = vld [vmem:[%s1 + $0xbe0] sm:$0xff]
    %v420 = vld [vmem:[%s1 + $0xbe8] sm:$0xff]
    %v421 = vld [vmem:[%s1 + $0xbf0] sm:$0xff]
    %v422 = vld [vmem:[%s1 + $0xbf8] sm:$0xff]
    %v423 = vld [vmem:[%s2] sm:$0x1]
    %v425 = vperm.slane %v423, 0
    %451 = vst [vmem:[#allocation1] ss:$4 sm:$0xff] %v15
    %s452 = scalar_lea.vmem [#allocation1], 1
    %453 = vst [vmem:[%s452] ss:$4 sm:$0xff] %v21
    %s454 = scalar_lea.vmem [#allocation1], 2
    %455 = vst [vmem:[%s454] ss:$4 sm:$0xff] %v27
    %s456 = scalar_lea.vmem [#allocation1], 3
    %457 = vst [vmem:[%s456] ss:$4 sm:$0xff] %v33
    %s458 = scalar_lea.vmem [#allocation1], 32
    %459 = vst [vmem:[%s458] ss:$4 sm:$0xff] %v16
    %s460 = scalar_lea.vmem [#allocation1], 33
    %461 = vst [vmem:[%s460] ss:$4 sm:$0xff] %v22
    %s462 = scalar_lea.vmem [#allocation1], 34
    %463 = vst [vmem:[%s462] ss:$4 sm:$0xff] %v28
    %s464 = scalar_lea.vmem [#allocation1], 35
    %465 = vst [vmem:[%s464] ss:$4 sm:$0xff] %v34
    %v466 = vld.sshfl [vmem:[#allocation1] sm:$0xff pattern:$0x73625140]
    %v467 = vld.sshfl [vmem:[#allocation1 + $0x8] sm:$0xff pattern:$0x73625140]
    %v468 = vld.sshfl [vmem:[#allocation1 + $0x10] sm:$0xff pattern:$0x73625140]
    %v469 = vld.sshfl [vmem:[#allocation1 + $0x18] sm:$0xff pattern:$0x73625140]
    %v470 = vld.sshfl [vmem:[#allocation1 + $0x20] sm:$0xff pattern:$0x73625140]
    %v471 = vld.sshfl [vmem:[#allocation1 + $0x28] sm:$0xff pattern:$0x73625140]
    %v472 = vld.sshfl [vmem:[#allocation1 + $0x30] sm:$0xff pattern:$0x73625140]
    %v473 = vld.sshfl [vmem:[#allocation1 + $0x38] sm:$0xff pattern:$0x73625140]
    %474 = vst [vmem:[#allocation1] ss:$4 sm:$0xff] %v17
    %475 = vst [vmem:[%s452] ss:$4 sm:$0xff] %v23
    %476 = vst [vmem:[%s454] ss:$4 sm:$0xff] %v29
    %477 = vst [vmem:[%s456] ss:$4 sm:$0xff] %v35
    %478 = vst [vmem:[%s458] ss:$4 sm:$0xff] %v18
    %479 = vst [vmem:[%s460] ss:$4 sm:$0xff] %v24
    %480 = vst [vmem:[%s462] ss:$4 sm:$0xff] %v30
    %481 = vst [vmem:[%s464] ss:$4 sm:$0xff] %v36
    %v482 = vld.sshfl [vmem:[#allocation1] sm:$0xff pattern:$0x73625140]
    %v483 = vld.sshfl [vmem:[#allocation1 + $0x8] sm:$0xff pattern:$0x73625140]
    %v484 = vld.sshfl [vmem:[#allocation1 + $0x10] sm:$0xff pattern:$0x73625140]
    %v485 = vld.sshfl [vmem:[#allocation1 + $0x18] sm:$0xff pattern:$0x73625140]
    %v486 = vld.sshfl [vmem:[#allocation1 + $0x20] sm:$0xff pattern:$0x73625140]
    %v487 = vld.sshfl [vmem:[#allocation1 + $0x28] sm:$0xff pattern:$0x73625140]
    %v488 = vld.sshfl [vmem:[#allocation1 + $0x30] sm:$0xff pattern:$0x73625140]
    %v489 = vld.sshfl [vmem:[#allocation1 + $0x38] sm:$0xff pattern:$0x73625140]
    %490 = vst [vmem:[#allocation1] ss:$4 sm:$0xff] %v19
    %491 = vst [vmem:[%s452] ss:$4 sm:$0xff] %v25
    %492 = vst [vmem:[%s454] ss:$4 sm:$0xff] %v31
    %493 = vst [vmem:[%s456] ss:$4 sm:$0xff] %v37
    %494 = vst [vmem:[%s458] ss:$4 sm:$0xff] %v20
    %495 = vst [vmem:[%s460] ss:$4 sm:$0xff] %v26
    %496 = vst [vmem:[%s462] ss:$4 sm:$0xff] %v32
    %497 = vst [vmem:[%s464] ss:$4 sm:$0xff] %v38
    %v498 = vld.sshfl [vmem:[#allocation1] sm:$0xff pattern:$0x73625140]
    %v499 = vld.sshfl [vmem:[#allocation1 + $0x8] sm:$0xff pattern:$0x73625140]
    %v500 = vld.sshfl [vmem:[#allocation1 + $0x10] sm:$0xff pattern:$0x73625140]
    %v501 = vld.sshfl [vmem:[#allocation1 + $0x18] sm:$0xff pattern:$0x73625140]
    %v502 = vld.sshfl [vmem:[#allocation1 + $0x20] sm:$0xff pattern:$0x73625140]
    %v503 = vld.sshfl [vmem:[#allocation1 + $0x28] sm:$0xff pattern:$0x73625140]
    %v504 = vld.sshfl [vmem:[#allocation1 + $0x30] sm:$0xff pattern:$0x73625140]
    %v505 = vld.sshfl [vmem:[#allocation1 + $0x38] sm:$0xff pattern:$0x73625140]
    %530 = vmatpush.msra.mxu0 %v54
    %531 = vmatpush.msra.mxu0 %v53
    %532 = vmatpush.msra.mxu0 %v52
    %533 = vmatpush.msra.mxu0 %v51
    %534 = vmatpush.msra.mxu0 %v50
    %535 = vmatpush.msra.mxu0 %v49
    %536 = vmatpush.msra.mxu0 %v48
    %537 = vmatpush.msra.mxu0 %v47
    %538 = vmatpush.msra.mxu0 %v46
    %539 = vmatpush.msra.mxu0 %v45
    %540 = vmatpush.msra.mxu0 %v44
    %541 = vmatpush.msra.mxu0 %v43
    %542 = vmatpush.msra.mxu0 %v42
    %543 = vmatpush.msra.mxu0 %v41
    %544 = vmatpush.msra.mxu0 %v40
    %545 = vmatpush.msra.mxu0 %v39
    %546 = vmatmul.f32.gmra.mxu0 %v466
    %v547 = vpop.f32.mrf.mxu0
    %v548 = vadd.f32 %v425, %v547
    %549 = vdwg.mxu0
    %550 = vmatpush.msra.mxu0 %v70
    %551 = vmatpush.msra.mxu0 %v69
    %552 = vmatpush.msra.mxu0 %v68
    %553 = vmatpush.msra.mxu0 %v67
    %554 = vmatpush.msra.mxu0 %v66
    %555 = vmatpush.msra.mxu0 %v65
    %556 = vmatpush.msra.mxu0 %v64
    %557 = vmatpush.msra.mxu0 %v63
    %558 = vmatpush.msra.mxu0 %v62
    %559 = vmatpush.msra.mxu0 %v61
    %560 = vmatpush.msra.mxu0 %v60
    %561 = vmatpush.msra.mxu0 %v59
    %562 = vmatpush.msra.mxu0 %v58
    %563 = vmatpush.msra.mxu0 %v57
    %564 = vmatpush.msra.mxu0 %v56
    %565 = vmatpush.msra.mxu0 %v55
    %566 = vmatmul.f32.gmra.mxu0 %v467
    %v567 = vpop.f32.mrf.mxu0
    %v568 = vadd.f32 %v548, %v567
    %569 = vdwg.mxu0
    %570 = vmatpush.msra.mxu0 %v86
    %571 = vmatpush.msra.mxu0 %v85
    %572 = vmatpush.msra.mxu0 %v84
    %573 = vmatpush.msra.mxu0 %v83
    %574 = vmatpush.msra.mxu0 %v82
    %575 = vmatpush.msra.mxu0 %v81
    %576 = vmatpush.msra.mxu0 %v80
    %577 = vmatpush.msra.mxu0 %v79
    %578 = vmatpush.msra.mxu0 %v78
    %579 = vmatpush.msra.mxu0 %v77
    %580 = vmatpush.msra.mxu0 %v76
    %581 = vmatpush.msra.mxu0 %v75
    %582 = vmatpush.msra.mxu0 %v74
    %583 = vmatpush.msra.mxu0 %v73
    %584 = vmatpush.msra.mxu0 %v72
    %585 = vmatpush.msra.mxu0 %v71
    %586 = vmatmul.f32.gmra.mxu0 %v468
    %v587 = vpop.f32.mrf.mxu0
    %v588 = vadd.f32 %v568, %v587
    %589 = vdwg.mxu0
    %590 = vmatpush.msra.mxu0 %v102
    %591 = vmatpush.msra.mxu0 %v101
    %592 = vmatpush.msra.mxu0 %v100
    %593 = vmatpush.msra.mxu0 %v99
    %594 = vmatpush.msra.mxu0 %v98
    %595 = vmatpush.msra.mxu0 %v97
    %596 = vmatpush.msra.mxu0 %v96
    %597 = vmatpush.msra.mxu0 %v95
    %598 = vmatpush.msra.mxu0 %v94
    %599 = vmatpush.msra.mxu0 %v93
    %600 = vmatpush.msra.mxu0 %v92
    %601 = vmatpush.msra.mxu0 %v91
    %602 = vmatpush.msra.mxu0 %v90
    %603 = vmatpush.msra.mxu0 %v89
    %604 = vmatpush.msra.mxu0 %v88
    %605 = vmatpush.msra.mxu0 %v87
    %606 = vmatmul.f32.gmra.mxu0 %v469
    %v607 = vpop.f32.mrf.mxu0
    %v608 = vadd.f32 %v588, %v607
    %609 = vdwg.mxu0
    %610 = vmatpush.msra.mxu0 %v118
    %611 = vmatpush.msra.mxu0 %v117
    %612 = vmatpush.msra.mxu0 %v116
    %613 = vmatpush.msra.mxu0 %v115
    %614 = vmatpush.msra.mxu0 %v114
    %615 = vmatpush.msra.mxu0 %v113
    %616 = vmatpush.msra.mxu0 %v112
    %617 = vmatpush.msra.mxu0 %v111
    %618 = vmatpush.msra.mxu0 %v110
    %619 = vmatpush.msra.mxu0 %v109
    %620 = vmatpush.msra.mxu0 %v108
    %621 = vmatpush.msra.mxu0 %v107
    %622 = vmatpush.msra.mxu0 %v106
    %623 = vmatpush.msra.mxu0 %v105
    %624 = vmatpush.msra.mxu0 %v104
    %625 = vmatpush.msra.mxu0 %v103
    %626 = vmatmul.f32.gmra.mxu0 %v470
    %v627 = vpop.f32.mrf.mxu0
    %v628 = vadd.f32 %v608, %v627
    %629 = vdwg.mxu0
    %630 = vmatpush.msra.mxu0 %v134
    %631 = vmatpush.msra.mxu0 %v133
    %632 = vmatpush.msra.mxu0 %v132
    %633 = vmatpush.msra.mxu0 %v131
    %634 = vmatpush.msra.mxu0 %v130
    %635 = vmatpush.msra.mxu0 %v129
    %636 = vmatpush.msra.mxu0 %v128
    %637 = vmatpush.msra.mxu0 %v127
    %638 = vmatpush.msra.mxu0 %v126
    %639 = vmatpush.msra.mxu0 %v125
    %640 = vmatpush.msra.mxu0 %v124
    %641 = vmatpush.msra.mxu0 %v123
    %642 = vmatpush.msra.mxu0 %v122
    %643 = vmatpush.msra.mxu0 %v121
    %644 = vmatpush.msra.mxu0 %v120
    %645 = vmatpush.msra.mxu0 %v119
    %646 = vmatmul.f32.gmra.mxu0 %v471
    %v647 = vpop.f32.mrf.mxu0
    %v648 = vadd.f32 %v628, %v647
    %649 = vdwg.mxu0
    %650 = vmatpush.msra.mxu0 %v150
    %651 = vmatpush.msra.mxu0 %v149
    %652 = vmatpush.msra.mxu0 %v148
    %653 = vmatpush.msra.mxu0 %v147
    %654 = vmatpush.msra.mxu0 %v146
    %655 = vmatpush.msra.mxu0 %v145
    %656 = vmatpush.msra.mxu0 %v144
    %657 = vmatpush.msra.mxu0 %v143
    %658 = vmatpush.msra.mxu0 %v142
    %659 = vmatpush.msra.mxu0 %v141
    %660 = vmatpush.msra.mxu0 %v140
    %661 = vmatpush.msra.mxu0 %v139
    %662 = vmatpush.msra.mxu0 %v138
    %663 = vmatpush.msra.mxu0 %v137
    %664 = vmatpush.msra.mxu0 %v136
    %665 = vmatpush.msra.mxu0 %v135
    %666 = vmatmul.f32.gmra.mxu0 %v472
    %v667 = vpop.f32.mrf.mxu0
    %v668 = vadd.f32 %v648, %v667
    %669 = vdwg.mxu0
    %670 = vmatpush.msra.mxu0 %v166
    %671 = vmatpush.msra.mxu0 %v165
    %672 = vmatpush.msra.mxu0 %v164
    %673 = vmatpush.msra.mxu0 %v163
    %674 = vmatpush.msra.mxu0 %v162
    %675 = vmatpush.msra.mxu0 %v161
    %676 = vmatpush.msra.mxu0 %v160
    %677 = vmatpush.msra.mxu0 %v159
    %678 = vmatpush.msra.mxu0 %v158
    %679 = vmatpush.msra.mxu0 %v157
    %680 = vmatpush.msra.mxu0 %v156
    %681 = vmatpush.msra.mxu0 %v155
    %682 = vmatpush.msra.mxu0 %v154
    %683 = vmatpush.msra.mxu0 %v153
    %684 = vmatpush.msra.mxu0 %v152
    %685 = vmatpush.msra.mxu0 %v151
    %686 = vmatmul.f32.gmra.mxu0 %v473
    %v687 = vpop.f32.mrf.mxu0
    %v688 = vadd.f32 %v668, %v687
    %689 = vdwg.mxu0
    %690 = vmatpush.msra.mxu0 %v182
    %691 = vmatpush.msra.mxu0 %v181
    %692 = vmatpush.msra.mxu0 %v180
    %693 = vmatpush.msra.mxu0 %v179
    %694 = vmatpush.msra.mxu0 %v178
    %695 = vmatpush.msra.mxu0 %v177
    %696 = vmatpush.msra.mxu0 %v176
    %697 = vmatpush.msra.mxu0 %v175
    %698 = vmatpush.msra.mxu0 %v174
    %699 = vmatpush.msra.mxu0 %v173
    %700 = vmatpush.msra.mxu0 %v172
    %701 = vmatpush.msra.mxu0 %v171
    %702 = vmatpush.msra.mxu0 %v170
    %703 = vmatpush.msra.mxu0 %v169
    %704 = vmatpush.msra.mxu0 %v168
    %705 = vmatpush.msra.mxu0 %v167
    %706 = vmatmul.f32.gmra.mxu0 %v482
    %v707 = vpop.f32.mrf.mxu0
    %v708 = vadd.f32 %v688, %v707
    %709 = vdwg.mxu0
    %710 = vmatpush.msra.mxu0 %v198
    %711 = vmatpush.msra.mxu0 %v197
    %712 = vmatpush.msra.mxu0 %v196
    %713 = vmatpush.msra.mxu0 %v195
    %714 = vmatpush.msra.mxu0 %v194
    %715 = vmatpush.msra.mxu0 %v193
    %716 = vmatpush.msra.mxu0 %v192
    %717 = vmatpush.msra.mxu0 %v191
    %718 = vmatpush.msra.mxu0 %v190
    %719 = vmatpush.msra.mxu0 %v189
    %720 = vmatpush.msra.mxu0 %v188
    %721 = vmatpush.msra.mxu0 %v187
    %722 = vmatpush.msra.mxu0 %v186
    %723 = vmatpush.msra.mxu0 %v185
    %724 = vmatpush.msra.mxu0 %v184
    %725 = vmatpush.msra.mxu0 %v183
    %726 = vmatmul.f32.gmra.mxu0 %v483
    %v727 = vpop.f32.mrf.mxu0
    %v728 = vadd.f32 %v708, %v727
    %729 = vdwg.mxu0
    %730 = vmatpush.msra.mxu0 %v214
    %731 = vmatpush.msra.mxu0 %v213
    %732 = vmatpush.msra.mxu0 %v212
    %733 = vmatpush.msra.mxu0 %v211
    %734 = vmatpush.msra.mxu0 %v210
    %735 = vmatpush.msra.mxu0 %v209
    %736 = vmatpush.msra.mxu0 %v208
    %737 = vmatpush.msra.mxu0 %v207
    %738 = vmatpush.msra.mxu0 %v206
    %739 = vmatpush.msra.mxu0 %v205
    %740 = vmatpush.msra.mxu0 %v204
    %741 = vmatpush.msra.mxu0 %v203
    %742 = vmatpush.msra.mxu0 %v202
    %743 = vmatpush.msra.mxu0 %v201
    %744 = vmatpush.msra.mxu0 %v200
    %745 = vmatpush.msra.mxu0 %v199
    %746 = vmatmul.f32.gmra.mxu0 %v484
    %v747 = vpop.f32.mrf.mxu0
    %v748 = vadd.f32 %v728, %v747
    %749 = vdwg.mxu0
    %750 = vmatpush.msra.mxu0 %v230
    %751 = vmatpush.msra.mxu0 %v229
    %752 = vmatpush.msra.mxu0 %v228
    %753 = vmatpush.msra.mxu0 %v227
    %754 = vmatpush.msra.mxu0 %v226
    %755 = vmatpush.msra.mxu0 %v225
    %756 = vmatpush.msra.mxu0 %v224
    %757 = vmatpush.msra.mxu0 %v223
    %758 = vmatpush.msra.mxu0 %v222
    %759 = vmatpush.msra.mxu0 %v221
    %760 = vmatpush.msra.mxu0 %v220
    %761 = vmatpush.msra.mxu0 %v219
    %762 = vmatpush.msra.mxu0 %v218
    %763 = vmatpush.msra.mxu0 %v217
    %764 = vmatpush.msra.mxu0 %v216
    %765 = vmatpush.msra.mxu0 %v215
    %766 = vmatmul.f32.gmra.mxu0 %v485
    %v767 = vpop.f32.mrf.mxu0
    %v768 = vadd.f32 %v748, %v767
    %769 = vdwg.mxu0
    %770 = vmatpush.msra.mxu0 %v246
    %771 = vmatpush.msra.mxu0 %v245
    %772 = vmatpush.msra.mxu0 %v244
    %773 = vmatpush.msra.mxu0 %v243
    %774 = vmatpush.msra.mxu0 %v242
    %775 = vmatpush.msra.mxu0 %v241
    %776 = vmatpush.msra.mxu0 %v240
    %777 = vmatpush.msra.mxu0 %v239
    %778 = vmatpush.msra.mxu0 %v238
    %779 = vmatpush.msra.mxu0 %v237
    %780 = vmatpush.msra.mxu0 %v236
    %781 = vmatpush.msra.mxu0 %v235
    %782 = vmatpush.msra.mxu0 %v234
    %783 = vmatpush.msra.mxu0 %v233
    %784 = vmatpush.msra.mxu0 %v232
    %785 = vmatpush.msra.mxu0 %v231
    %786 = vmatmul.f32.gmra.mxu0 %v486
    %v787 = vpop.f32.mrf.mxu0
    %v788 = vadd.f32 %v768, %v787
    %789 = vdwg.mxu0
    %790 = vmatpush.msra.mxu0 %v262
    %791 = vmatpush.msra.mxu0 %v261
    %792 = vmatpush.msra.mxu0 %v260
    %793 = vmatpush.msra.mxu0 %v259
    %794 = vmatpush.msra.mxu0 %v258
    %795 = vmatpush.msra.mxu0 %v257
    %796 = vmatpush.msra.mxu0 %v256
    %797 = vmatpush.msra.mxu0 %v255
    %798 = vmatpush.msra.mxu0 %v254
    %799 = vmatpush.msra.mxu0 %v253
    %800 = vmatpush.msra.mxu0 %v252
    %801 = vmatpush.msra.mxu0 %v251
    %802 = vmatpush.msra.mxu0 %v250
    %803 = vmatpush.msra.mxu0 %v249
    %804 = vmatpush.msra.mxu0 %v248
    %805 = vmatpush.msra.mxu0 %v247
    %806 = vmatmul.f32.gmra.mxu0 %v487
    %v807 = vpop.f32.mrf.mxu0
    %v808 = vadd.f32 %v788, %v807
    %809 = vdwg.mxu0
    %810 = vmatpush.msra.mxu0 %v278
    %811 = vmatpush.msra.mxu0 %v277
    %812 = vmatpush.msra.mxu0 %v276
    %813 = vmatpush.msra.mxu0 %v275
    %814 = vmatpush.msra.mxu0 %v274
    %815 = vmatpush.msra.mxu0 %v273
    %816 = vmatpush.msra.mxu0 %v272
    %817 = vmatpush.msra.mxu0 %v271
    %818 = vmatpush.msra.mxu0 %v270
    %819 = vmatpush.msra.mxu0 %v269
    %820 = vmatpush.msra.mxu0 %v268
    %821 = vmatpush.msra.mxu0 %v267
    %822 = vmatpush.msra.mxu0 %v266
    %823 = vmatpush.msra.mxu0 %v265
    %824 = vmatpush.msra.mxu0 %v264
    %825 = vmatpush.msra.mxu0 %v263
    %826 = vmatmul.f32.gmra.mxu0 %v488
    %v827 = vpop.f32.mrf.mxu0
    %v828 = vadd.f32 %v808, %v827
    %829 = vdwg.mxu0
    %830 = vmatpush.msra.mxu0 %v294
    %831 = vmatpush.msra.mxu0 %v293
    %832 = vmatpush.msra.mxu0 %v292
    %833 = vmatpush.msra.mxu0 %v291
    %834 = vmatpush.msra.mxu0 %v290
    %835 = vmatpush.msra.mxu0 %v289
    %836 = vmatpush.msra.mxu0 %v288
    %837 = vmatpush.msra.mxu0 %v287
    %838 = vmatpush.msra.mxu0 %v286
    %839 = vmatpush.msra.mxu0 %v285
    %840 = vmatpush.msra.mxu0 %v284
    %841 = vmatpush.msra.mxu0 %v283
    %842 = vmatpush.msra.mxu0 %v282
    %843 = vmatpush.msra.mxu0 %v281
    %844 = vmatpush.msra.mxu0 %v280
    %845 = vmatpush.msra.mxu0 %v279
    %846 = vmatmul.f32.gmra.mxu0 %v489
    %v847 = vpop.f32.mrf.mxu0
    %v848 = vadd.f32 %v828, %v847
    %849 = vdwg.mxu0
    %850 = vmatpush.msra.mxu0 %v310
    %851 = vmatpush.msra.mxu0 %v309
    %852 = vmatpush.msra.mxu0 %v308
    %853 = vmatpush.msra.mxu0 %v307
    %854 = vmatpush.msra.mxu0 %v306
    %855 = vmatpush.msra.mxu0 %v305
    %856 = vmatpush.msra.mxu0 %v304
    %857 = vmatpush.msra.mxu0 %v303
    %858 = vmatpush.msra.mxu0 %v302
    %859 = vmatpush.msra.mxu0 %v301
    %860 = vmatpush.msra.mxu0 %v300
    %861 = vmatpush.msra.mxu0 %v299
    %862 = vmatpush.msra.mxu0 %v298
    %863 = vmatpush.msra.mxu0 %v297
    %864 = vmatpush.msra.mxu0 %v296
    %865 = vmatpush.msra.mxu0 %v295
    %866 = vmatmul.f32.gmra.mxu0 %v498
    %v867 = vpop.f32.mrf.mxu0
    %v868 = vadd.f32 %v848, %v867
    %869 = vdwg.mxu0
    %870 = vmatpush.msra.mxu0 %v326
    %871 = vmatpush.msra.mxu0 %v325
    %872 = vmatpush.msra.mxu0 %v324
    %873 = vmatpush.msra.mxu0 %v323
    %874 = vmatpush.msra.mxu0 %v322
    %875 = vmatpush.msra.mxu0 %v321
    %876 = vmatpush.msra.mxu0 %v320
    %877 = vmatpush.msra.mxu0 %v319
    %878 = vmatpush.msra.mxu0 %v318
    %879 = vmatpush.msra.mxu0 %v317
    %880 = vmatpush.msra.mxu0 %v316
    %881 = vmatpush.msra.mxu0 %v315
    %882 = vmatpush.msra.mxu0 %v314
    %883 = vmatpush.msra.mxu0 %v313
    %884 = vmatpush.msra.mxu0 %v312
    %885 = vmatpush.msra.mxu0 %v311
    %886 = vmatmul.f32.gmra.mxu0 %v499
    %v887 = vpop.f32.mrf.mxu0
    %v888 = vadd.f32 %v868, %v887
    %889 = vdwg.mxu0
    %890 = vmatpush.msra.mxu0 %v342
    %891 = vmatpush.msra.mxu0 %v341
    %892 = vmatpush.msra.mxu0 %v340
    %893 = vmatpush.msra.mxu0 %v339
    %894 = vmatpush.msra.mxu0 %v338
    %895 = vmatpush.msra.mxu0 %v337
    %896 = vmatpush.msra.mxu0 %v336
    %897 = vmatpush.msra.mxu0 %v335
    %898 = vmatpush.msra.mxu0 %v334
    %899 = vmatpush.msra.mxu0 %v333
    %900 = vmatpush.msra.mxu0 %v332
    %901 = vmatpush.msra.mxu0 %v331
    %902 = vmatpush.msra.mxu0 %v330
    %903 = vmatpush.msra.mxu0 %v329
    %904 = vmatpush.msra.mxu0 %v328
    %905 = vmatpush.msra.mxu0 %v327
    %906 = vmatmul.f32.gmra.mxu0 %v500
    %v907 = vpop.f32.mrf.mxu0
    %v908 = vadd.f32 %v888, %v907
    %909 = vdwg.mxu0
    %910 = vmatpush.msra.mxu0 %v358
    %911 = vmatpush.msra.mxu0 %v357
    %912 = vmatpush.msra.mxu0 %v356
    %913 = vmatpush.msra.mxu0 %v355
    %914 = vmatpush.msra.mxu0 %v354
    %915 = vmatpush.msra.mxu0 %v353
    %916 = vmatpush.msra.mxu0 %v352
    %917 = vmatpush.msra.mxu0 %v351
    %918 = vmatpush.msra.mxu0 %v350
    %919 = vmatpush.msra.mxu0 %v349
    %920 = vmatpush.msra.mxu0 %v348
    %921 = vmatpush.msra.mxu0 %v347
    %922 = vmatpush.msra.mxu0 %v346
    %923 = vmatpush.msra.mxu0 %v345
    %924 = vmatpush.msra.mxu0 %v344
    %925 = vmatpush.msra.mxu0 %v343
    %926 = vmatmul.f32.gmra.mxu0 %v501
    %v927 = vpop.f32.mrf.mxu0
    %v928 = vadd.f32 %v908, %v927
    %929 = vdwg.mxu0
    %930 = vmatpush.msra.mxu0 %v374
    %931 = vmatpush.msra.mxu0 %v373
    %932 = vmatpush.msra.mxu0 %v372
    %933 = vmatpush.msra.mxu0 %v371
    %934 = vmatpush.msra.mxu0 %v370
    %935 = vmatpush.msra.mxu0 %v369
    %936 = vmatpush.msra.mxu0 %v368
    %937 = vmatpush.msra.mxu0 %v367
    %938 = vmatpush.msra.mxu0 %v366
    %939 = vmatpush.msra.mxu0 %v365
    %940 = vmatpush.msra.mxu0 %v364
    %941 = vmatpush.msra.mxu0 %v363
    %942 = vmatpush.msra.mxu0 %v362
    %943 = vmatpush.msra.mxu0 %v361
    %944 = vmatpush.msra.mxu0 %v360
    %945 = vmatpush.msra.mxu0 %v359
    %946 = vmatmul.f32.gmra.mxu0 %v502
    %v947 = vpop.f32.mrf.mxu0
    %v948 = vadd.f32 %v928, %v947
    %949 = vdwg.mxu0
    %950 = vmatpush.msra.mxu0 %v390
    %951 = vmatpush.msra.mxu0 %v389
    %952 = vmatpush.msra.mxu0 %v388
    %953 = vmatpush.msra.mxu0 %v387
    %954 = vmatpush.msra.mxu0 %v386
    %955 = vmatpush.msra.mxu0 %v385
    %956 = vmatpush.msra.mxu0 %v384
    %957 = vmatpush.msra.mxu0 %v383
    %958 = vmatpush.msra.mxu0 %v382
    %959 = vmatpush.msra.mxu0 %v381
    %960 = vmatpush.msra.mxu0 %v380
    %961 = vmatpush.msra.mxu0 %v379
    %962 = vmatpush.msra.mxu0 %v378
    %963 = vmatpush.msra.mxu0 %v377
    %964 = vmatpush.msra.mxu0 %v376
    %965 = vmatpush.msra.mxu0 %v375
    %966 = vmatmul.f32.gmra.mxu0 %v503
    %v967 = vpop.f32.mrf.mxu0
    %v968 = vadd.f32 %v948, %v967
    %969 = vdwg.mxu0
    %970 = vmatpush.msra.mxu0 %v406
    %971 = vmatpush.msra.mxu0 %v405
    %972 = vmatpush.msra.mxu0 %v404
    %973 = vmatpush.msra.mxu0 %v403
    %974 = vmatpush.msra.mxu0 %v402
    %975 = vmatpush.msra.mxu0 %v401
    %976 = vmatpush.msra.mxu0 %v400
    %977 = vmatpush.msra.mxu0 %v399
    %978 = vmatpush.msra.mxu0 %v398
    %979 = vmatpush.msra.mxu0 %v397
    %980 = vmatpush.msra.mxu0 %v396
    %981 = vmatpush.msra.mxu0 %v395
    %982 = vmatpush.msra.mxu0 %v394
    %983 = vmatpush.msra.mxu0 %v393
    %984 = vmatpush.msra.mxu0 %v392
    %985 = vmatpush.msra.mxu0 %v391
    %986 = vmatmul.f32.gmra.mxu0 %v504
    %v987 = vpop.f32.mrf.mxu0
    %v988 = vadd.f32 %v968, %v987
    %989 = vdwg.mxu0
    %990 = vmatpush.msra.mxu0 %v422
    %991 = vmatpush.msra.mxu0 %v421
    %992 = vmatpush.msra.mxu0 %v420
    %993 = vmatpush.msra.mxu0 %v419
    %994 = vmatpush.msra.mxu0 %v418
    %995 = vmatpush.msra.mxu0 %v417
    %996 = vmatpush.msra.mxu0 %v416
    %997 = vmatpush.msra.mxu0 %v415
    %998 = vmatpush.msra.mxu0 %v414
    %999 = vmatpush.msra.mxu0 %v413
    %1000 = vmatpush.msra.mxu0 %v412
    %1001 = vmatpush.msra.mxu0 %v411
    %1002 = vmatpush.msra.mxu0 %v410
    %1003 = vmatpush.msra.mxu0 %v409
    %1004 = vmatpush.msra.mxu0 %v408
    %1005 = vmatpush.msra.mxu0 %v407
    %1006 = vmatmul.f32.gmra.mxu0 %v505
    %v1007 = vpop.f32.mrf.mxu0
    %v1008 = vadd.f32 %v988, %v1007
    %1009 = vdwg.mxu0
    %vm1010 = vcmask 80896
    %1011 = vst.msk [vmem:[#allocation2] sm:$0xff] %vm1010, %v1008
    // Predicated region
    $region14: #{tpu_custom_call.1} parent=1 // pred_check
      _
    $region15: #{tpu_custom_call.1} parent=1 // pred_check_branch
      %1013 = sbr.rel (0) target = $region17
    $region16: #{tpu_custom_call.1} parent=1 // pred_region
      %1015 = vsyncadd [#allocation3], 96
      %s1016 = sshll.u32 [#allocation2], 4
      %s1017 = int_to_ptr.vmem [resolvable:$true] %s1016
      %s1018 = sshll.u32 %s3, 4
      %s1019 = int_to_ptr.hbm [resolvable:$true] %s1018
      %1024 = dma.vmem_to_hbm [thread:$0]  %s1017, 32, %s1019, [#allocation3], 32, 32, 2
    $region17: #{tpu_custom_call.1} parent=1 // pred_fallthru
      _
    // Predicated region
    $region18: #{tpu_custom_call.1} parent=1 // pred_check
      _
    $region19: #{tpu_custom_call.1} parent=1 // pred_check_branch
      %1026 = sbr.rel (0) target = $region21
    $region20: #{tpu_custom_call.1} parent=1 // pred_region
      %1028 = dma.done [#allocation3], 128
    $region21: #{tpu_custom_call.1} parent=1 // pred_fallthru
      _
    %1029 = vsyncpa [#allocation3], 1

</llo_original>
